<compile_context>
chip_gen: v7x
topology: tpu7x:2x2x1
jax: 0.10.0
libtpu: 0.0.40
codegen_flags: <defaults>
</compile_context>

<pallas_src>
import jax
import jax.numpy as jnp
from jax import lax
from jax.experimental import pallas as pl
from jax.experimental.pallas import tpu as pltpu


def _round_up(x, m):
    return ((x + m - 1) // m) * m


def _value_mlp_kernel(h_ref, z_ref, w1h_ref, w1z_ref, b1_ref,
                      w2_ref, b2_ref, w3_ref, b3_ref, o_ref):
    """One batch tile of the 3-layer value MLP.

    h_ref:(TM,Dh) bf16   z_ref:(TM,Dz) bf16
    w1h:(Dh,H) bf16      w1z:(Dz,H) bf16     b1:(1,H) f32
    w2:(H,H)  bf16       b2:(1,H) f32
    w3:(1,H)  bf16       b3:(1,) f32 (SMEM scalar)
    o_ref:(1,1,TM) f32 — batch along lanes, so stores are lane-dense.
    """
    # Layer 1 (fused concat): cat([h, z]) @ W1 == h @ W1_h + z @ W1_z.
    a = jnp.dot(h_ref[...], w1h_ref[...], preferred_element_type=jnp.float32)
    a = a + jnp.dot(z_ref[...], w1z_ref[...], preferred_element_type=jnp.float32)
    h1 = jnp.maximum(a + b1_ref[...], 0.0)                         # (TM, H) f32

    # Layer 2.
    h2 = jnp.dot(h1.astype(jnp.bfloat16), w2_ref[...],
                 preferred_element_type=jnp.float32)
    h2 = jnp.maximum(h2 + b2_ref[...], 0.0)                        # (TM, H) f32

    # Layer 3: (1,H) x (TM,H)^T -> (1,TM). Contracting the last axis of both
    # operands puts the batch in the lane dim, so the final store is dense and
    # no in-kernel transpose is needed.
    v = lax.dot_general(w3_ref[...], h2.astype(jnp.bfloat16),
                        (((1,), (1,)), ((), ())),
                        preferred_element_type=jnp.float32)        # (1, TM)
    v = v + b3_ref[0]
    o_ref[...] = v.reshape(o_ref.shape)


def value_model_forward(h, z, params, *, tile_m=256):
    """h: (B, rnn_hidden_dim), z: (B, latent_dim)  ->  (B,) value estimates."""
    w1, b1, w2, b2, w3, b3 = params
    B, Dh = h.shape
    Dz = z.shape[1]
    H = w1.shape[1]

    # bf16 activation/weight stream into the MXU, f32 accumulation.
    bf = jnp.bfloat16
    h_bf = h.astype(bf)
    z_bf = z.astype(bf)
    w1h = w1[:Dh].astype(bf)                   # split W1 -> fused concat
    w1z = w1[Dh:].astype(bf)
    w2b = w2.astype(bf)
    w3r = w3.reshape(1, H).astype(bf)          # (H,1) -> (1,H) row
    b1f = b1.reshape(1, H).astype(jnp.float32)
    b2f = b2.reshape(1, H).astype(jnp.float32)
    b3s = b3.reshape(1).astype(jnp.float32)    # scalar, lives in SMEM

    # Batch tile: one block for small B; 256-row tiles (sweepable) for large B
    # so the ~0.35 us per-grid-step overhead is amortized while keeping the
    # (TM,H) f32 intermediates inside the vreg budget.  Large B gives >=2 grid
    # steps on the "parallel" axis so both v7x TensorCores get work.
    tm = min(tile_m, _round_up(B, 8))
    b_pad = _round_up(B, tm)
    if b_pad != B:
        pad = ((0, b_pad - B), (0, 0))
        h_bf = jnp.pad(h_bf, pad)
        z_bf = jnp.pad(z_bf, pad)
    n_tiles = b_pad // tm

    out = pl.pallas_call(
        _value_mlp_kernel,
        out_shape=jax.ShapeDtypeStruct((n_tiles, 1, tm), jnp.float32),
        grid_spec=pltpu.PrefetchScalarGridSpec(
            num_scalar_prefetch=0,
            grid=(n_tiles,),
            in_specs=[
                pl.BlockSpec((tm, Dh), lambda i: (i, 0)),            # h tile
                pl.BlockSpec((tm, Dz), lambda i: (i, 0)),            # z tile
                pl.BlockSpec((Dh, H), lambda i: (0, 0)),             # W1_h
                pl.BlockSpec((Dz, H), lambda i: (0, 0)),             # W1_z
                pl.BlockSpec((1, H), lambda i: (0, 0)),              # b1
                pl.BlockSpec((H, H), lambda i: (0, 0)),              # W2
                pl.BlockSpec((1, H), lambda i: (0, 0)),              # b2
                pl.BlockSpec((1, H), lambda i: (0, 0)),              # W3 row
                pl.BlockSpec(memory_space=pltpu.MemorySpace.SMEM),   # b3 scalar
            ],
            out_specs=pl.BlockSpec((1, 1, tm), lambda i: (i, 0, 0)),
        ),
        compiler_params=pltpu.CompilerParams(
            dimension_semantics=("parallel",),
            # Above v5e's 16 MiB default scoped limit, safely within v7x's
            # 64 MiB physical VMEM; usage at these sizes is tiny anyway.
            vmem_limit_bytes=32 * 1024 * 1024,
        ),
    )(h_bf, z_bf, w1h, w1z, b1f, w2b, b2f, w3r, b3s)

    # (n_tiles, 1, tm) -> (B,)   (the squeeze(-1) of the PyTorch module)
    return out.reshape(b_pad)[:B]


def init_params(key, rnn_hidden_dim, latent_dim, hidden_units):
    d_in = rnn_hidden_dim + latent_dim
    ks = jax.random.split(key, 6)

    def lin(kw, kb, fan_in, fan_out):
        bound = 1.0 / jnp.sqrt(fan_in)
        w = jax.random.uniform(kw, (fan_in, fan_out), jnp.float32, -bound, bound)
        b = jax.random.uniform(kb, (1, fan_out), jnp.float32, -bound, bound)
        return w, b

    w1, b1 = lin(ks[0], ks[1], d_in, hidden_units)
    w2, b2 = lin(ks[2], ks[3], hidden_units, hidden_units)
    w3, b3 = lin(ks[4], ks[5], hidden_units, 1)
    return (w1, b1, w2, b2, w3, b3)


def _reference(h, z, params):
    """Pure-JAX reference mimicking the kernel numerics (bf16 in, f32 accumulate)."""
    w1, b1, w2, b2, w3, b3 = params
    f = lambda a: a.astype(jnp.bfloat16).astype(jnp.float32)
    x = jnp.concatenate([f(h), f(z)], axis=-1)
    x1 = jnp.maximum(x @ f(w1) + b1, 0.0)
    x2 = jnp.maximum(f(x1) @ f(w2) + b2, 0.0)
    v = f(x2) @ f(w3) + b3
    return v[:, 0]


if __name__ == "__main__":
    B = 16
    rnn_hidden_dim = 32
    latent_dim = 16
    hidden_units = 64

    key = jax.random.PRNGKey(0)
    kh, kz, kp = jax.random.split(key, 3)
    h = jax.random.normal(kh, (B, rnn_hidden_dim), jnp.float32)
    z = jax.random.normal(kz, (B, latent_dim), jnp.float32)
    params = init_params(kp, rnn_hidden_dim, latent_dim, hidden_units)

    out = jax.block_until_ready(value_model_forward(h, z, params))
    ref = _reference(h, z, params)

    assert out.shape == (B,)
    assert jnp.allclose(out, ref, atol=1e-3, rtol=1e-3), (
        f"max abs diff {jnp.max(jnp.abs(out - ref))}"
    )
    print("KERNEL_OK")
</pallas_src>

<mosaic_0001>
module attributes {stable_mosaic.version = 11 : i64} {
  func.func @_value_mlp_kernel(%arg0: i32, %arg1: memref<16x32xbf16, #tpu.memory_space<vmem>>, %arg2: memref<16x16xbf16, #tpu.memory_space<vmem>>, %arg3: memref<32x64xbf16, #tpu.memory_space<vmem>>, %arg4: memref<16x64xbf16, #tpu.memory_space<vmem>>, %arg5: memref<1x64xf32, #tpu.memory_space<vmem>>, %arg6: memref<64x64xbf16, #tpu.memory_space<vmem>>, %arg7: memref<1x64xf32, #tpu.memory_space<vmem>>, %arg8: memref<1x64xbf16, #tpu.memory_space<vmem>>, %arg9: memref<1xf32, #tpu.memory_space<smem>>, %arg10: memref<1x1x16xf32, #tpu.memory_space<vmem>>) attributes {dimension_semantics = [#tpu.dimension_semantics<parallel>], iteration_bounds = array<i64: 1>, scalar_prefetch = 0 : i64, scratch_operands = 0 : i64, tpu.core_type = #tpu.core_type<tc>, window_params = [{transform_indices = @transform_0, window_bounds = array<i64: 16, 32>}, {transform_indices = @transform_1, window_bounds = array<i64: 16, 16>}, {pipeline_mode = #tpu.pipeline_mode<synchronous>, transform_indices = @transform_2, window_bounds = array<i64: 32, 64>}, {pipeline_mode = #tpu.pipeline_mode<synchronous>, transform_indices = @transform_3, window_bounds = array<i64: 16, 64>}, {pipeline_mode = #tpu.pipeline_mode<synchronous>, transform_indices = @transform_4, window_bounds = array<i64: 1, 64>}, {pipeline_mode = #tpu.pipeline_mode<synchronous>, transform_indices = @transform_5, window_bounds = array<i64: 64, 64>}, {pipeline_mode = #tpu.pipeline_mode<synchronous>, transform_indices = @transform_6, window_bounds = array<i64: 1, 64>}, {pipeline_mode = #tpu.pipeline_mode<synchronous>, transform_indices = @transform_7, window_bounds = array<i64: 1, 64>}, {transform_indices = @transform_8, window_bounds = array<i64: 1>}, {transform_indices = @transform_9, window_bounds = array<i64: 1, 1, 16>}]} {
    %c0 = arith.constant 0 : index
    %c0_0 = arith.constant 0 : index
    %0 = vector.load %arg1[%c0, %c0_0] : memref<16x32xbf16, #tpu.memory_space<vmem>>, vector<16x32xbf16>
    %c0_1 = arith.constant 0 : index
    %c0_2 = arith.constant 0 : index
    %1 = vector.load %arg3[%c0_1, %c0_2] : memref<32x64xbf16, #tpu.memory_space<vmem>>, vector<32x64xbf16>
    %cst = arith.constant dense<0.000000e+00> : vector<16x64xf32>
    %2 = tpu.matmul %0, %1, %cst {dimension_numbers = #tpu.dot_dimension_numbers<[1], [0], [0], [1], [0, 0, 1, 1], [], []>} : vector<16x32xbf16>, vector<32x64xbf16>, vector<16x64xf32> -> vector<16x64xf32>
    %c0_3 = arith.constant 0 : index
    %c0_4 = arith.constant 0 : index
    %3 = vector.load %arg2[%c0_3, %c0_4] : memref<16x16xbf16, #tpu.memory_space<vmem>>, vector<16x16xbf16>
    %c0_5 = arith.constant 0 : index
    %c0_6 = arith.constant 0 : index
    %4 = vector.load %arg4[%c0_5, %c0_6] : memref<16x64xbf16, #tpu.memory_space<vmem>>, vector<16x64xbf16>
    %cst_7 = arith.constant dense<0.000000e+00> : vector<16x64xf32>
    %5 = tpu.matmul %3, %4, %cst_7 {dimension_numbers = #tpu.dot_dimension_numbers<[1], [0], [0], [1], [0, 0, 1, 1], [], []>} : vector<16x16xbf16>, vector<16x64xbf16>, vector<16x64xf32> -> vector<16x64xf32>
    %6 = arith.addf %2, %5 : vector<16x64xf32>
    %c0_8 = arith.constant 0 : index
    %c0_9 = arith.constant 0 : index
    %7 = vector.load %arg5[%c0_8, %c0_9] : memref<1x64xf32, #tpu.memory_space<vmem>>, vector<1x64xf32>
    %8 = vector.broadcast %7 : vector<1x64xf32> to vector<16x64xf32>
    %9 = arith.addf %6, %8 : vector<16x64xf32>
    %cst_10 = arith.constant 0.000000e+00 : f32
    %10 = vector.broadcast %cst_10 : f32 to vector<16x64xf32>
    %11 = arith.maximumf %9, %10 : vector<16x64xf32>
    %12 = arith.truncf %11 : vector<16x64xf32> to vector<16x64xbf16>
    %c0_11 = arith.constant 0 : index
    %c0_12 = arith.constant 0 : index
    %13 = vector.load %arg6[%c0_11, %c0_12] : memref<64x64xbf16, #tpu.memory_space<vmem>>, vector<64x64xbf16>
    %cst_13 = arith.constant dense<0.000000e+00> : vector<16x64xf32>
    %14 = tpu.matmul %12, %13, %cst_13 {dimension_numbers = #tpu.dot_dimension_numbers<[1], [0], [0], [1], [0, 0, 1, 1], [], []>} : vector<16x64xbf16>, vector<64x64xbf16>, vector<16x64xf32> -> vector<16x64xf32>
    %c0_14 = arith.constant 0 : index
    %c0_15 = arith.constant 0 : index
    %15 = vector.load %arg7[%c0_14, %c0_15] : memref<1x64xf32, #tpu.memory_space<vmem>>, vector<1x64xf32>
    %16 = vector.broadcast %15 : vector<1x64xf32> to vector<16x64xf32>
    %17 = arith.addf %14, %16 : vector<16x64xf32>
    %cst_16 = arith.constant 0.000000e+00 : f32
    %18 = vector.broadcast %cst_16 : f32 to vector<16x64xf32>
    %19 = arith.maximumf %17, %18 : vector<16x64xf32>
    %c0_17 = arith.constant 0 : index
    %c0_18 = arith.constant 0 : index
    %20 = vector.load %arg8[%c0_17, %c0_18] : memref<1x64xbf16, #tpu.memory_space<vmem>>, vector<1x64xbf16>
    %21 = arith.truncf %19 : vector<16x64xf32> to vector<16x64xbf16>
    %cst_19 = arith.constant dense<0.000000e+00> : vector<1x16xf32>
    %22 = tpu.matmul %20, %21, %cst_19 {dimension_numbers = #tpu.dot_dimension_numbers<[1], [1], [0], [0], [0, 0, 1, 0], [], []>} : vector<1x64xbf16>, vector<16x64xbf16>, vector<1x16xf32> -> vector<1x16xf32>
    %c0_20 = arith.constant 0 : index
    %23 = memref.load %arg9[%c0_20] : memref<1xf32, #tpu.memory_space<smem>>
    %24 = vector.broadcast %23 : f32 to vector<1x16xf32>
    %25 = arith.addf %22, %24 : vector<1x16xf32>
    %26 = vector.shape_cast %25 : vector<1x16xf32> to vector<1x1x16xf32>
    %c0_21 = arith.constant 0 : index
    %c0_22 = arith.constant 0 : index
    %c0_23 = arith.constant 0 : index
    %27 = vector.load %arg10[%c0_21, %c0_22, %c0_23] : memref<1x1x16xf32, #tpu.memory_space<vmem>>, vector<1x1x16xf32>
    tpu.vector_store %arg10[%c0_21, %c0_22, %c0_23], %26 {strides = array<i32>} : memref<1x1x16xf32, #tpu.memory_space<vmem>>, vector<1x1x16xf32>,
    return
  }
  func.func @transform_0(%arg0: i32) -> (i32, i32) {
    %c0_i32 = arith.constant 0 : i32
    %c0_i32_0 = arith.constant 0 : i32
    return %arg0, %c0_i32 : i32, i32
  }
  func.func @transform_1(%arg0: i32) -> (i32, i32) {
    %c0_i32 = arith.constant 0 : i32
    %c0_i32_0 = arith.constant 0 : i32
    return %arg0, %c0_i32 : i32, i32
  }
  func.func @transform_2(%arg0: i32) -> (i32, i32) {
    %c0_i32 = arith.constant 0 : i32
    %c0_i32_0 = arith.constant 0 : i32
    %c0_i32_1 = arith.constant 0 : i32
    return %c0_i32, %c0_i32_0 : i32, i32
  }
  func.func @transform_3(%arg0: i32) -> (i32, i32) {
    %c0_i32 = arith.constant 0 : i32
    %c0_i32_0 = arith.constant 0 : i32
    %c0_i32_1 = arith.constant 0 : i32
    return %c0_i32, %c0_i32_0 : i32, i32
  }
  func.func @transform_4(%arg0: i32) -> (i32, i32) {
    %c0_i32 = arith.constant 0 : i32
    %c0_i32_0 = arith.constant 0 : i32
    %c0_i32_1 = arith.constant 0 : i32
    return %c0_i32, %c0_i32_0 : i32, i32
  }
  func.func @transform_5(%arg0: i32) -> (i32, i32) {
    %c0_i32 = arith.constant 0 : i32
    %c0_i32_0 = arith.constant 0 : i32
    %c0_i32_1 = arith.constant 0 : i32
    return %c0_i32, %c0_i32_0 : i32, i32
  }
  func.func @transform_6(%arg0: i32) -> (i32, i32) {
    %c0_i32 = arith.constant 0 : i32
    %c0_i32_0 = arith.constant 0 : i32
    %c0_i32_1 = arith.constant 0 : i32
    return %c0_i32, %c0_i32_0 : i32, i32
  }
  func.func @transform_7(%arg0: i32) -> (i32, i32) {
    %c0_i32 = arith.constant 0 : i32
    %c0_i32_0 = arith.constant 0 : i32
    %c0_i32_1 = arith.constant 0 : i32
    return %c0_i32, %c0_i32_0 : i32, i32
  }
  func.func @transform_8(%arg0: i32) -> i32 {
    %c0_i32 = arith.constant 0 : i32
    %c0_i32_0 = arith.constant 0 : i32
    return %c0_i32 : i32
  }
  func.func @transform_9(%arg0: i32) -> (i32, i32, i32) {
    %c0_i32 = arith.constant 0 : i32
    %c0_i32_0 = arith.constant 0 : i32
    %c0_i32_1 = arith.constant 0 : i32
    return %arg0, %c0_i32, %c0_i32_0 : i32, i32, i32
  }
}

</mosaic_0001>

<llo_original>
// kernel: tpu_custom_call.1
$region0: #{tpu_custom_call.1}
  #allocation0 [shape = 'u32[]', space=smem, size = 0x4, offset = 0x4, fixed_abs, tag = 'smem constant byte address 0x4 - core index']
  #allocation1 [shape = 'u32[144,128]{1,0:T(1,128)}', space=vmem, size = 0x12000, scoped, tag = 'internal scratch']
  #allocation2 [shape = 'f32[1]{0:T(128)S(6)}', space=smem, size = 0x200, scoped, tag = 'scoped memory for tpu_custom_call.1']
  %s0 = inlined_call_operand.hbm [shape: bf16[16,32], index: 0, kind: input, shape index: {}]
  %s1 = inlined_call_operand.hbm [shape: bf16[16,16], index: 1, kind: input, shape index: {}]
  %s2 = inlined_call_operand.hbm [shape: bf16[32,64], index: 2, kind: input, shape index: {}]
  %s3 = inlined_call_operand.vmem [shape: bf16[16,64], index: 3, kind: input, shape index: {}]
  %s4 = inlined_call_operand.vmem [shape: f32[1,64], index: 4, kind: input, shape index: {}]
  %s5 = inlined_call_operand.hbm [shape: bf16[64,64], index: 5, kind: input, shape index: {}]
  %s6 = inlined_call_operand.vmem [shape: f32[1,64], index: 6, kind: input, shape index: {}]
  %s7 = inlined_call_operand.vmem [shape: bf16[1,64], index: 7, kind: input, shape index: {}]
  %s8 = inlined_call_operand.<no memory space> [shape: f32[1], index: 8, kind: input, shape index: {}]
  %s9 = inlined_call_operand.hbm [shape: f32[1,1,16], index: 9, kind: output, shape index: {}]
  %s10 = sld [smem:[#allocation0]]
  $region62: #{tpu_custom_call.1} parent=0
    _
  %s12 = ssub.s32 1, %s10
  %s13 = scalar_select 0, %s12, %s10
  %14 = sst [smem:[#allocation2]] %s8
  $region1: #{tpu_custom_call.1} parent=0
    #allocation3 [shape = 'u8[4096]{0}', space=vmem, size = 0x1000, scoped, tag = 'input window, operand 0, single buffered']
    #allocation4 [shape = 's32[1]{0}', space=sflag, size = 0x4, scoped, tag = 'scoped memory for tpu_custom_call.1']
    #allocation5 [shape = 's32[1]{0}', space=sflag, size = 0x4, scoped, tag = 'scoped memory for tpu_custom_call.1']
    #allocation6 [shape = 'u8[4096]{0}', space=vmem, size = 0x1000, scoped, tag = 'input window, operand 1, single buffered']
    #allocation7 [shape = 's32[1]{0}', space=sflag, size = 0x4, scoped, tag = 'scoped memory for tpu_custom_call.1']
    #allocation8 [shape = 'u8[8192]{0}', space=vmem, size = 0x2000, scoped, tag = 'input window, operand 2, single buffered']
    #allocation9 [shape = 'u8[16384]{0}', space=vmem, size = 0x4000, scoped, tag = 'input window, operand 5, single buffered']
    #allocation10 [shape = 's32[1]{0}', space=sflag, size = 0x4, scoped, tag = 'scoped memory for tpu_custom_call.1']
    #allocation11 [shape = 'u8[512]{0}', space=vmem, size = 0x400, scoped, tag = 'output window, operand 0, single buffered']
    %15 = vsyncpa [#allocation4], 0
    %16 = vsyncpa [#allocation7], 0
    %17 = vsyncpa [#allocation10], 0
    %18 = vsyncpa [#allocation5], 0
    // Predicated region
    $region2: #{tpu_custom_call.1} parent=1 // pred_check
      _
    $region3: #{tpu_custom_call.1} parent=1 // pred_check_branch
      %20 = sbr.rel (0) target = $region5
    $region4: #{tpu_custom_call.1} parent=1 // pred_region
      %s22 = ssub.s32 128, 128
      %23 = vsyncadd [#allocation4], %s22
      %s24 = sshll.u32 [#allocation3], 4
      %s25 = int_to_ptr.vmem [resolvable:$true] %s24
      %30 = dma.hbm_to_vmem [thread:$0]  %s0, 128, %s25, [#allocation4], 64, 64, 4
    $region5: #{tpu_custom_call.1} parent=1 // pred_fallthru
      _
    // Predicated region
    $region6: #{tpu_custom_call.1} parent=1 // pred_check
      _
    $region7: #{tpu_custom_call.1} parent=1 // pred_check_branch
      %32 = sbr.rel (0) target = $region9
    $region8: #{tpu_custom_call.1} parent=1 // pred_region
      %s34 = ssub.s32 128, 128
      %35 = vsyncadd [#allocation7], %s34
      %s36 = sshll.u32 [#allocation6], 4
      %s37 = int_to_ptr.vmem [resolvable:$true] %s36
      %42 = dma.hbm_to_vmem [thread:$0]  %s1, 128, %s37, [#allocation7], 64, 64, 4
    $region9: #{tpu_custom_call.1} parent=1 // pred_fallthru
      _
    // Predicated region
    $region10: #{tpu_custom_call.1} parent=1 // pred_check
      _
    $region11: #{tpu_custom_call.1} parent=1 // pred_check_branch
      %44 = sbr.rel (0) target = $region13
    $region12: #{tpu_custom_call.1} parent=1 // pred_region
      %s46 = ssub.s32 256, 256
      %47 = vsyncadd [#allocation7], %s46
      %s48 = sshll.u32 [#allocation8], 4
      %s49 = int_to_ptr.vmem [resolvable:$true] %s48
      %54 = dma.hbm_to_vmem [thread:$0]  %s2, 256, %s49, [#allocation7], 64, 64, 4
    $region13: #{tpu_custom_call.1} parent=1 // pred_fallthru
      _
    // Predicated region
    $region14: #{tpu_custom_call.1} parent=1 // pred_check
      _
    $region15: #{tpu_custom_call.1} parent=1 // pred_check_branch
      %56 = sbr.rel (0) target = $region17
    $region16: #{tpu_custom_call.1} parent=1 // pred_region
      _
    $region17: #{tpu_custom_call.1} parent=1 // pred_fallthru
      _
    // Predicated region
    $region18: #{tpu_custom_call.1} parent=1 // pred_check
      _
    $region19: #{tpu_custom_call.1} parent=1 // pred_check_branch
      %58 = sbr.rel (0) target = $region21
    $region20: #{tpu_custom_call.1} parent=1 // pred_region
      _
    $region21: #{tpu_custom_call.1} parent=1 // pred_fallthru
      _
    // Predicated region
    $region22: #{tpu_custom_call.1} parent=1 // pred_check
      _
    $region23: #{tpu_custom_call.1} parent=1 // pred_check_branch
      %60 = sbr.rel (0) target = $region25
    $region24: #{tpu_custom_call.1} parent=1 // pred_region
      %s62 = ssub.s32 512, 512
      %63 = vsyncadd [#allocation10], %s62
      %s64 = sshll.u32 [#allocation9], 4
      %s65 = int_to_ptr.vmem [resolvable:$true] %s64
      %70 = dma.hbm_to_vmem [thread:$0]  %s5, 512, %s65, [#allocation10], 64, 64, 4
    $region25: #{tpu_custom_call.1} parent=1 // pred_fallthru
      _
    // Predicated region
    $region26: #{tpu_custom_call.1} parent=1 // pred_check
      _
    $region27: #{tpu_custom_call.1} parent=1 // pred_check_branch
      %72 = sbr.rel (0) target = $region29
    $region28: #{tpu_custom_call.1} parent=1 // pred_region
      _
    $region29: #{tpu_custom_call.1} parent=1 // pred_fallthru
      _
    // Predicated region
    $region30: #{tpu_custom_call.1} parent=1 // pred_check
      _
    $region31: #{tpu_custom_call.1} parent=1 // pred_check_branch
      %74 = sbr.rel (0) target = $region33
    $region32: #{tpu_custom_call.1} parent=1 // pred_region
      _
    $region33: #{tpu_custom_call.1} parent=1 // pred_fallthru
      _
    // Predicated region
    $region34: #{tpu_custom_call.1} parent=1 // pred_check
      _
    $region35: #{tpu_custom_call.1} parent=1 // pred_check_branch
      %76 = sbr.rel (0) target = $region37
    $region36: #{tpu_custom_call.1} parent=1 // pred_region
      _
    $region37: #{tpu_custom_call.1} parent=1 // pred_fallthru
      _
    // Predicated region
    $region38: #{tpu_custom_call.1} parent=1 // pred_check
      _
    $region39: #{tpu_custom_call.1} parent=1 // pred_check_branch
      %78 = sbr.rel (0) target = $region41
    $region40: #{tpu_custom_call.1} parent=1 // pred_region
      %79 = dma.done [#allocation4], 128
    $region41: #{tpu_custom_call.1} parent=1 // pred_fallthru
      _
    // Predicated region
    $region42: #{tpu_custom_call.1} parent=1 // pred_check
      _
    $region43: #{tpu_custom_call.1} parent=1 // pred_check_branch
      %81 = sbr.rel (0) target = $region45
    $region44: #{tpu_custom_call.1} parent=1 // pred_region
      %82 = dma.done [#allocation7], 128
    $region45: #{tpu_custom_call.1} parent=1 // pred_fallthru
      _
    // Predicated region
    $region46: #{tpu_custom_call.1} parent=1 // pred_check
      _
    $region47: #{tpu_custom_call.1} parent=1 // pred_check_branch
      %84 = sbr.rel (0) target = $region49
    $region48: #{tpu_custom_call.1} parent=1 // pred_region
      %85 = dma.done [#allocation7], 256
    $region49: #{tpu_custom_call.1} parent=1 // pred_fallthru
      _
    // Predicated region
    $region50: #{tpu_custom_call.1} parent=1 // pred_check
      _
    $region51: #{tpu_custom_call.1} parent=1 // pred_check_branch
      %87 = sbr.rel (0) target = $region53
    $region52: #{tpu_custom_call.1} parent=1 // pred_region
      %88 = dma.done [#allocation10], 512
    $region53: #{tpu_custom_call.1} parent=1 // pred_fallthru
      _
    %v90 = vld [vmem:[#allocation3] sm:$0xf]
    %v91 = vld [vmem:[#allocation3 + $0x4] sm:$0xf]
    %v92 = vld [vmem:[#allocation8] sm:$0xf]
    %v93 = vld [vmem:[#allocation8 + $0x4] sm:$0xf]
    %v94 = vld [vmem:[#allocation8 + $0x8] sm:$0xf]
    %v95 = vld [vmem:[#allocation8 + $0xc] sm:$0xf]
    %v96 = vld [vmem:[#allocation6] sm:$0xf]
    %v97 = vld [vmem:[#allocation6 + $0x4] sm:$0xf]
    %v98 = vld [vmem:[%s3] sm:$0xf]
    %v99 = vld [vmem:[%s3 + $0x4] sm:$0xf]
    %v102 = vunpack.c.l.b16 %v96
    %v103 = vunpack.c.l.b16 %v97
    %v104 = vpack.c.b16 %v103, %v102
    %v107 = vunpack.c.l.b16 %v98
    %v108 = vunpack.c.l.b16 %v99
    %v109 = vpack.c.b16 %v108, %v107
    %vm111 = vcmask 130048
    %v113 = vsel %vm111, %v104, 0
    %115 = vmatprep.subr.bf16.mxu0 0
    %116 = vmatpush1.bf16.msra.mxu0 %v109
    %117 = vmatprep.subr.bf16.mxu0 0
    %118 = vmatpush1.bf16.msra.mxu0 0
    %119 = vmatprep.subr.bf16.mxu0 0
    %120 = vmatpush1.bf16.msra.mxu0 0
    %121 = vmatprep.subr.bf16.mxu0 0
    %122 = vmatpush1.bf16.msra.mxu0 0
    %123 = vmatprep.subr.bf16.mxu0 0
    %124 = vmatpush1.bf16.msra.mxu0 0
    %125 = vmatprep.subr.bf16.mxu0 0
    %126 = vmatpush1.bf16.msra.mxu0 0
    %127 = vmatprep.subr.bf16.mxu0 0
    %128 = vmatpush1.bf16.msra.mxu0 0
    %129 = vmatprep.subr.bf16.mxu0 0
    %130 = vmatpush1.bf16.msra.mxu0 0
    %131 = vmatprep.subr.bf16.mxu0 0
    %132 = vmatpush1.bf16.msra.mxu0 0
    %133 = vmatprep.subr.bf16.mxu0 0
    %134 = vmatpush1.bf16.msra.mxu0 0
    %135 = vmatprep.subr.bf16.mxu0 0
    %136 = vmatpush1.bf16.msra.mxu0 0
    %137 = vmatprep.subr.bf16.mxu0 0
    %138 = vmatpush1.bf16.msra.mxu0 0
    %139 = vmatprep.subr.bf16.mxu0 0
    %140 = vmatpush1.bf16.msra.mxu0 0
    %141 = vmatprep.subr.bf16.mxu0 0
    %142 = vmatpush1.bf16.msra.mxu0 0
    %143 = vmatprep.subr.bf16.mxu0 0
    %144 = vmatpush1.bf16.msra.mxu0 0
    %145 = vmatprep.subr.bf16.mxu0 0
    %146 = vmatpush1.bf16.msra.mxu0 0
    %147 = vmatprep.mubr.bf16.mxu0 0
    %148 = vmatmul.mubr.bf16.gmra.mrb[0].mxu0 %v113
    %v149 = vpop.f32.mrb[0].mxu0
    %v150 = vadd.f32 0.0, %v149
    %v151 = vpop.f32.mrb[0].mxu0
    %v152 = vpop.f32.mrb[0].mxu0
    %v153 = vadd.f32 0.0, %v152
    %v154 = vpop.f32.mrb[0].mxu0
    %155 = vdwg.mxu0
    %v158 = vunpack.c.l.b16 %v90
    %v159 = vunpack.c.l.b16 %v91
    %v160 = vpack.c.b16 %v159, %v158
    %v165 = vunpack.c.l.b16 %v92
    %v166 = vunpack.c.l.b16 %v93
    %v167 = vunpack.c.l.b16 %v94
    %v168 = vunpack.c.l.b16 %v95
    %v169 = vpack.c.b16 %v166, %v165
    %v170 = vpack.c.b16 %v168, %v167
    %vm173 = vcmask 261120
    %v175 = vsel %vm173, %v160, 0
    %177 = vmatprep.subr.bf16.mxu0 0
    %178 = vmatpush1.bf16.msra.mxu0 %v169
    %179 = vmatprep.subr.bf16.mxu0 0
    %180 = vmatpush1.bf16.msra.mxu0 %v170
    %181 = vmatprep.subr.bf16.mxu0 0
    %182 = vmatpush1.bf16.msra.mxu0 0
    %183 = vmatprep.subr.bf16.mxu0 0
    %184 = vmatpush1.bf16.msra.mxu0 0
    %185 = vmatprep.subr.bf16.mxu0 0
    %186 = vmatpush1.bf16.msra.mxu0 0
    %187 = vmatprep.subr.bf16.mxu0 0
    %188 = vmatpush1.bf16.msra.mxu0 0
    %189 = vmatprep.subr.bf16.mxu0 0
    %190 = vmatpush1.bf16.msra.mxu0 0
    %191 = vmatprep.subr.bf16.mxu0 0
    %192 = vmatpush1.bf16.msra.mxu0 0
    %193 = vmatprep.subr.bf16.mxu0 0
    %194 = vmatpush1.bf16.msra.mxu0 0
    %195 = vmatprep.subr.bf16.mxu0 0
    %196 = vmatpush1.bf16.msra.mxu0 0
    %197 = vmatprep.subr.bf16.mxu0 0
    %198 = vmatpush1.bf16.msra.mxu0 0
    %199 = vmatprep.subr.bf16.mxu0 0
    %200 = vmatpush1.bf16.msra.mxu0 0
    %201 = vmatprep.subr.bf16.mxu0 0
    %202 = vmatpush1.bf16.msra.mxu0 0
    %203 = vmatprep.subr.bf16.mxu0 0
    %204 = vmatpush1.bf16.msra.mxu0 0
    %205 = vmatprep.subr.bf16.mxu0 0
    %206 = vmatpush1.bf16.msra.mxu0 0
    %207 = vmatprep.subr.bf16.mxu0 0
    %208 = vmatpush1.bf16.msra.mxu0 0
    %209 = vmatprep.mubr.bf16.mxu0 0
    %210 = vmatmul.mubr.bf16.gmra.mrb[0].mxu0 %v175
    %v211 = vpop.f32.mrb[0].mxu0
    %v212 = vadd.f32 %v150, %v211
    %v213 = vpop.f32.mrb[0].mxu0
    %v214 = vpop.f32.mrb[0].mxu0
    %v215 = vadd.f32 %v153, %v214
    %v216 = vpop.f32.mrb[0].mxu0
    %217 = vdwg.mxu0
    %v218 = vld [vmem:[%s4] sm:$0x1]
    %v220 = vlaneseq
    %v221 = vshrl.u32 %v220, 7
    %v222 = vsub.s32 0, %v221
    %v223 = vrot.slane %v218, %v222
    %v225 = vadd.f32 %v212, %v223
    %v226 = vadd.f32 %v215, %v223
    %v227 = vmax.f32 %v225, 0.0
    %v228 = vmax.f32 %v226, 0.0
    %v229 = vpack.c.bf16 %v228, %v227
    %v230 = vld [vmem:[#allocation9] sm:$0xf]
    %v231 = vld [vmem:[#allocation9 + $0x4] sm:$0xf]
    %v232 = vld [vmem:[#allocation9 + $0x8] sm:$0xf]
    %v233 = vld [vmem:[#allocation9 + $0xc] sm:$0xf]
    %v234 = vld [vmem:[#allocation9 + $0x10] sm:$0xf]
    %v235 = vld [vmem:[#allocation9 + $0x14] sm:$0xf]
    %v236 = vld [vmem:[#allocation9 + $0x18] sm:$0xf]
    %v237 = vld [vmem:[#allocation9 + $0x1c] sm:$0xf]
    %v238 = vld [vmem:[%s6] sm:$0x1]
    %v240 = vlaneseq
    %v241 = vshrl.u32 %v240, 7
    %v242 = vsub.s32 0, %v241
    %v243 = vrot.slane %v238, %v242
    %v253 = vunpack.c.l.b16 %v230
    %v254 = vunpack.c.l.b16 %v231
    %v255 = vunpack.c.l.b16 %v232
    %v256 = vunpack.c.l.b16 %v233
    %v257 = vunpack.c.l.b16 %v234
    %v258 = vunpack.c.l.b16 %v235
    %v259 = vunpack.c.l.b16 %v236
    %v260 = vunpack.c.l.b16 %v237
    %v261 = vpack.c.b16 %v254, %v253
    %v262 = vpack.c.b16 %v256, %v255
    %v263 = vpack.c.b16 %v258, %v257
    %v264 = vpack.c.b16 %v260, %v259
    %vm269 = vcmask 523264
    %v271 = vsel %vm269, %v229, 0
    %273 = vmatprep.subr.bf16.mxu0 0
    %274 = vmatpush1.bf16.msra.mxu0 %v261
    %275 = vmatprep.subr.bf16.mxu0 0
    %276 = vmatpush1.bf16.msra.mxu0 %v262
    %277 = vmatprep.subr.bf16.mxu0 0
    %278 = vmatpush1.bf16.msra.mxu0 %v263
    %279 = vmatprep.subr.bf16.mxu0 0
    %280 = vmatpush1.bf16.msra.mxu0 %v264
    %281 = vmatprep.subr.bf16.mxu0 0
    %282 = vmatpush1.bf16.msra.mxu0 0
    %283 = vmatprep.subr.bf16.mxu0 0
    %284 = vmatpush1.bf16.msra.mxu0 0
    %285 = vmatprep.subr.bf16.mxu0 0
    %286 = vmatpush1.bf16.msra.mxu0 0
    %287 = vmatprep.subr.bf16.mxu0 0
    %288 = vmatpush1.bf16.msra.mxu0 0
    %289 = vmatprep.subr.bf16.mxu0 0
    %290 = vmatpush1.bf16.msra.mxu0 0
    %291 = vmatprep.subr.bf16.mxu0 0
    %292 = vmatpush1.bf16.msra.mxu0 0
    %293 = vmatprep.subr.bf16.mxu0 0
    %294 = vmatpush1.bf16.msra.mxu0 0
    %295 = vmatprep.subr.bf16.mxu0 0
    %296 = vmatpush1.bf16.msra.mxu0 0
    %297 = vmatprep.subr.bf16.mxu0 0
    %298 = vmatpush1.bf16.msra.mxu0 0
    %299 = vmatprep.subr.bf16.mxu0 0
    %300 = vmatpush1.bf16.msra.mxu0 0
    %301 = vmatprep.subr.bf16.mxu0 0
    %302 = vmatpush1.bf16.msra.mxu0 0
    %303 = vmatprep.subr.bf16.mxu0 0
    %304 = vmatpush1.bf16.msra.mxu0 0
    %305 = vmatprep.mubr.bf16.mxu0 0
    %306 = vmatmul.mubr.bf16.gmra.mrb[0].mxu0 %v271
    %v307 = vpop.f32.mrb[0].mxu0
    %v308 = vadd.f32 %v243, %v307
    %v309 = vpop.f32.mrb[0].mxu0
    %v310 = vpop.f32.mrb[0].mxu0
    %v311 = vadd.f32 %v243, %v310
    %v312 = vpop.f32.mrb[0].mxu0
    %313 = vdwg.mxu0
    %v314 = vmax.f32 %v308, 0.0
    %v315 = vmax.f32 %v311, 0.0
    %v316 = vld [vmem:[%s7] sm:$0x1]
    %v317 = vpack.c.bf16 %v315, %v314
    %s318 = sld [smem:[#allocation2]]
    %v319 = vstv %s318
    %v321 = vsel %vm269, %v316, 0
    %v324 = vsel %vm269, %v317, 0
    %326 = vmatprep.subr.bf16.mxu0 0
    %327 = vmatpush1.bf16.xpose.msra.mxu0 %v324
    %328 = vmatprep.subr.bf16.mxu0 0
    %329 = vmatpush1.bf16.xpose.msra.mxu0 0
    %330 = vmatprep.subr.bf16.mxu0 0
    %331 = vmatpush1.bf16.xpose.msra.mxu0 0
    %332 = vmatprep.subr.bf16.mxu0 0
    %333 = vmatpush1.bf16.xpose.msra.mxu0 0
    %334 = vmatprep.subr.bf16.mxu0 0
    %335 = vmatpush1.bf16.xpose.msra.mxu0 0
    %336 = vmatprep.subr.bf16.mxu0 0
    %337 = vmatpush1.bf16.xpose.msra.mxu0 0
    %338 = vmatprep.subr.bf16.mxu0 0
    %339 = vmatpush1.bf16.xpose.msra.mxu0 0
    %340 = vmatprep.subr.bf16.mxu0 0
    %341 = vmatpush1.bf16.xpose.msra.mxu0 0
    %342 = vmatprep.subr.bf16.mxu0 0
    %343 = vmatpush1.bf16.xpose.msra.mxu0 0
    %344 = vmatprep.subr.bf16.mxu0 0
    %345 = vmatpush1.bf16.xpose.msra.mxu0 0
    %346 = vmatprep.subr.bf16.mxu0 0
    %347 = vmatpush1.bf16.xpose.msra.mxu0 0
    %348 = vmatprep.subr.bf16.mxu0 0
    %349 = vmatpush1.bf16.xpose.msra.mxu0 0
    %350 = vmatprep.subr.bf16.mxu0 0
    %351 = vmatpush1.bf16.xpose.msra.mxu0 0
    %352 = vmatprep.subr.bf16.mxu0 0
    %353 = vmatpush1.bf16.xpose.msra.mxu0 0
    %354 = vmatprep.subr.bf16.mxu0 0
    %355 = vmatpush1.bf16.xpose.msra.mxu0 0
    %356 = vmatprep.subr.bf16.mxu0 0
    %357 = vmatpush1.bf16.xpose.msra.mxu0 0
    %358 = vmatprep.mubr.bf16.mxu0 0
    %359 = vmatmul.mubr.bf16.gmra.mrb[0].mxu0 %v321
    %v360 = vpop.f32.mrb[0].mxu0
    %v361 = vadd.f32 %v319, %v360
    %v362 = vpop.f32.mrb[0].mxu0
    %v363 = vpop.f32.mrb[0].mxu0
    %v364 = vpop.f32.mrb[0].mxu0
    %365 = vdwg.mxu0
    %vm366 = vcmask 122880
    %367 = vst.msk [vmem:[#allocation11] sm:$0x1] %vm366, %v361
    // Predicated region
    $region54: #{tpu_custom_call.1} parent=1 // pred_check
      _
    $region55: #{tpu_custom_call.1} parent=1 // pred_check_branch
      %369 = sbr.rel (0) target = $region57
    $region56: #{tpu_custom_call.1} parent=1 // pred_region
      %s371 = ssub.s32 16, 16
      %372 = vsyncadd [#allocation5], %s371
      %s374 = sshll.u32 [#allocation11], 4
      %s375 = int_to_ptr.vmem [resolvable:$true] %s374
      %377 = dma.vmem_to_hbm [thread:$0]  %s375, 16, %s9, [#allocation5]
    $region57: #{tpu_custom_call.1} parent=1 // pred_fallthru
      _
    // Predicated region
    $region58: #{tpu_custom_call.1} parent=1 // pred_check
      _
    $region59: #{tpu_custom_call.1} parent=1 // pred_check_branch
      %379 = sbr.rel (0) target = $region61
    $region60: #{tpu_custom_call.1} parent=1 // pred_region
      %380 = dma.done [#allocation5], 16
    $region61: #{tpu_custom_call.1} parent=1 // pred_fallthru
      _
    %381 = vsyncpa [#allocation4], 1
    %382 = vsyncpa [#allocation7], 1
    %383 = vsyncpa [#allocation10], 1
    %384 = vsyncpa [#allocation5], 1

</llo_original>
